<compile_context>
chip_gen: v7x
topology: tpu7x:2x2x1
jax: 0.10.0
libtpu: 0.0.40
codegen_flags: <defaults>
</compile_context>

<pallas_src>
import math

import jax
import jax.numpy as jnp
from jax import lax
from jax.experimental import pallas as pl
from jax.experimental.pallas import tpu as pltpu


def rnn_kernel(scalars_ref, h0_ref, w_hh_ref, packed_ref, y_ref, hT_ref):
    """Full RNN recurrence + batched output projection, single invocation.

    scalars_ref: (B*T + 1,) SMEM  -- x flattened batch-first (x[b,t] at b*T+t), then b_out
    h0_ref:      (B, H)     VMEM  -- initial hidden state
    w_hh_ref:    (H, H)     VMEM  -- W_hh^T
    packed_ref:  (3, H)     VMEM  -- rows: [w_ih row (input_size==1), b_ih+b_hh, w_out row]
    y_ref:       (B, T)     VMEM  -- per-step outputs, time on the lane axis
    hT_ref:      (B, H)     VMEM  -- final hidden state
    """
    B, T = y_ref.shape

    packed = packed_ref[...]          # (3, H)
    w_ih = packed[0]                  # (H,)
    bias = packed[1]                  # (H,) = b_ih + b_hh
    w_out = packed[2]                 # (H,)
    b_out = scalars_ref[B * T]        # scalar

    # Hoisted input projection: ih[t] is (B, H), built from SMEM scalars as
    # scalar * vector (VPU splat), no cross-lane broadcast and no x VMEM tile.
    ih = []
    for t in range(T):
        rows = [scalars_ref[b * T + t] * w_ih for b in range(B)]
        ih.append(jnp.stack(rows, axis=0) + bias)       # (B, H)

    # Recurrence: fully unrolled (T static, tiny); carry h stays in vregs,
    # hidden states kept as traced values (no VMEM scratch round-trip).
    w_hh = w_hh_ref[...]
    h = h0_ref[...]
    h_list = []
    for t in range(T):
        h = jnp.tanh(ih[t] + jnp.dot(h, w_hh, preferred_element_type=jnp.float32))
        h_list.append(h)

    hT_ref[...] = h                                     # final hidden state from the carry

    # Batched output projection over all steps + single bulk store, y laid out (B, T)
    # so no wrapper transpose is needed and time sits on the lane axis.
    h_stack = jnp.stack(h_list, axis=1)                 # (B, T, H)
    y_ref[...] = jnp.sum(h_stack * w_out, axis=-1) + b_out   # (B, T)


def rnn_forward(x, h_state, params):
    """x: (B, T, 1) float32, h_state: (1, B, H) float32 -> ((B, T, 1), (1, B, H))."""
    B, T, I = x.shape
    H = params["w_hh"].shape[0]
    assert I == 1  # TODO(synk): generalize w_ih packing for input_size > 1

    # Single SMEM scalar block: x (batch-first flat) + b_out.
    scalars = jnp.concatenate([
        x.reshape(B * T).astype(jnp.float32),
        params["b_out"].reshape(1).astype(jnp.float32),
    ])                                                              # (B*T + 1,)

    h0 = h_state.reshape(B, H).astype(jnp.float32)                  # (B, H)
    w_hh_t = params["w_hh"].T.astype(jnp.float32)                   # (H, H) = W_hh^T
    packed = jnp.stack([
        params["w_ih"].reshape(H),                                  # W_ih^T row (I == 1)
        params["b_ih"] + params["b_hh"],
        params["w_out"].reshape(H),
    ], axis=0).astype(jnp.float32)                                  # (3, H)

    y_bt, h_final = pl.pallas_call(
        rnn_kernel,
        out_shape=(
            jax.ShapeDtypeStruct((B, T), jnp.float32),
            jax.ShapeDtypeStruct((B, H), jnp.float32),
        ),
        in_specs=[
            pl.BlockSpec(memory_space=pltpu.MemorySpace.SMEM),      # scalars (x + b_out)
            pl.BlockSpec(memory_space=pltpu.MemorySpace.VMEM),      # h0
            pl.BlockSpec(memory_space=pltpu.MemorySpace.VMEM),      # W_hh^T
            pl.BlockSpec(memory_space=pltpu.MemorySpace.VMEM),      # packed params
        ],
        out_specs=(
            pl.BlockSpec(memory_space=pltpu.MemorySpace.VMEM),
            pl.BlockSpec(memory_space=pltpu.MemorySpace.VMEM),
        ),
    )(scalars, h0, w_hh_t, packed)

    # Only free reshapes left on the wrapper side (no transposes).
    return y_bt[..., None], h_final.reshape(1, B, H)


def init_params(key, input_size=1, hidden_size=32):
    """Deterministic init matching PyTorch's U(-1/sqrt(H), 1/sqrt(H)) scheme."""
    k = jax.random.split(key, 6)
    s = 1.0 / math.sqrt(hidden_size)
    return {
        "w_ih": jax.random.uniform(k[0], (hidden_size, input_size), jnp.float32, -s, s),
        "w_hh": jax.random.uniform(k[1], (hidden_size, hidden_size), jnp.float32, -s, s),
        "b_ih": jax.random.uniform(k[2], (hidden_size,), jnp.float32, -s, s),
        "b_hh": jax.random.uniform(k[3], (hidden_size,), jnp.float32, -s, s),
        "w_out": jax.random.uniform(k[4], (1, hidden_size), jnp.float32, -s, s),
        "b_out": jax.random.uniform(k[5], (1,), jnp.float32, -s, s),
    }


def rnn_forward_ref(x, h_state, params):
    """Pure-JAX reference (mirrors the PyTorch forward) for a correctness check."""
    B, T, I = x.shape
    H = params["w_hh"].shape[0]
    h = h_state.reshape(B, H)
    w_ih_t, w_hh_t = params["w_ih"].T, params["w_hh"].T
    b = params["b_ih"] + params["b_hh"]

    def step(h, x_t):
        h_new = jnp.tanh(x_t @ w_ih_t + h @ w_hh_t + b)
        y_t = h_new @ params["w_out"].T + params["b_out"]
        return h_new, y_t

    h_final, ys = lax.scan(step, h, jnp.transpose(x, (1, 0, 2)))
    return jnp.transpose(ys, (1, 0, 2)), h_final.reshape(1, B, H)


if __name__ == "__main__":
    key = jax.random.PRNGKey(0)
    k_param, k_x, k_h = jax.random.split(key, 3)

    B, T, I, H = 2, 8, 1, 32
    params = init_params(k_param, input_size=I, hidden_size=H)
    x = jax.random.normal(k_x, (B, T, I), jnp.float32)
    h_state = jax.random.normal(k_h, (1, B, H), jnp.float32)

    y, h_out = jax.jit(rnn_forward)(x, h_state, params)
    jax.block_until_ready((y, h_out))

    y_ref, h_ref = rnn_forward_ref(x, h_state, params)
    assert y.shape == (B, T, 1) and h_out.shape == (1, B, H)
    assert jnp.allclose(y, y_ref, atol=1e-5, rtol=1e-5)
    assert jnp.allclose(h_out, h_ref, atol=1e-5, rtol=1e-5)

    print("KERNEL_OK")
</pallas_src>

<mosaic_0001>
module attributes {stable_mosaic.version = 11 : i64} {
  func.func @rnn_kernel(%arg0: memref<17xf32, #tpu.memory_space<smem>>, %arg1: memref<2x32xf32, #tpu.memory_space<vmem>>, %arg2: memref<32x32xf32, #tpu.memory_space<vmem>>, %arg3: memref<3x32xf32, #tpu.memory_space<vmem>>, %arg4: memref<2x8xf32, #tpu.memory_space<vmem>>, %arg5: memref<2x32xf32, #tpu.memory_space<vmem>>) attributes {dimension_semantics = [], scalar_prefetch = 0 : i64, scratch_operands = 0 : i64, tpu.core_type = #tpu.core_type<tc>} {
    %c0 = arith.constant 0 : index
    %c0_0 = arith.constant 0 : index
    %0 = vector.load %arg3[%c0, %c0_0] : memref<3x32xf32, #tpu.memory_space<vmem>>, vector<3x32xf32>
    %1 = vector.extract_strided_slice %0 {offsets = [0, 0], sizes = [1, 32], strides = [1, 1]} : vector<3x32xf32> to vector<1x32xf32>
    %2 = vector.shape_cast %1 : vector<1x32xf32> to vector<32xf32>
    %3 = vector.extract_strided_slice %0 {offsets = [1, 0], sizes = [1, 32], strides = [1, 1]} : vector<3x32xf32> to vector<1x32xf32>
    %4 = vector.shape_cast %3 : vector<1x32xf32> to vector<32xf32>
    %5 = vector.extract_strided_slice %0 {offsets = [2, 0], sizes = [1, 32], strides = [1, 1]} : vector<3x32xf32> to vector<1x32xf32>
    %6 = vector.shape_cast %5 : vector<1x32xf32> to vector<32xf32>
    %c16 = arith.constant 16 : index
    %7 = memref.load %arg0[%c16] : memref<17xf32, #tpu.memory_space<smem>>
    %c0_1 = arith.constant 0 : index
    %8 = memref.load %arg0[%c0_1] : memref<17xf32, #tpu.memory_space<smem>>
    %9 = vector.broadcast %8 : f32 to vector<32xf32>
    %10 = arith.mulf %9, %2 : vector<32xf32>
    %c8 = arith.constant 8 : index
    %11 = memref.load %arg0[%c8] : memref<17xf32, #tpu.memory_space<smem>>
    %12 = vector.broadcast %11 : f32 to vector<32xf32>
    %13 = arith.mulf %12, %2 : vector<32xf32>
    %14 = vector.shape_cast %10 : vector<32xf32> to vector<1x32xf32>
    %15 = vector.shape_cast %13 : vector<32xf32> to vector<1x32xf32>
    %16 = tpu.concatenate %14, %15 in 0 : vector<1x32xf32>, vector<1x32xf32> -> vector<2x32xf32>
    %17 = vector.shape_cast %4 : vector<32xf32> to vector<1x32xf32>
    %18 = vector.broadcast %17 : vector<1x32xf32> to vector<2x32xf32>
    %19 = arith.addf %16, %18 : vector<2x32xf32>
    %c1 = arith.constant 1 : index
    %20 = memref.load %arg0[%c1] : memref<17xf32, #tpu.memory_space<smem>>
    %21 = vector.broadcast %20 : f32 to vector<32xf32>
    %22 = arith.mulf %21, %2 : vector<32xf32>
    %c9 = arith.constant 9 : index
    %23 = memref.load %arg0[%c9] : memref<17xf32, #tpu.memory_space<smem>>
    %24 = vector.broadcast %23 : f32 to vector<32xf32>
    %25 = arith.mulf %24, %2 : vector<32xf32>
    %26 = vector.shape_cast %22 : vector<32xf32> to vector<1x32xf32>
    %27 = vector.shape_cast %25 : vector<32xf32> to vector<1x32xf32>
    %28 = tpu.concatenate %26, %27 in 0 : vector<1x32xf32>, vector<1x32xf32> -> vector<2x32xf32>
    %29 = vector.shape_cast %4 : vector<32xf32> to vector<1x32xf32>
    %30 = vector.broadcast %29 : vector<1x32xf32> to vector<2x32xf32>
    %31 = arith.addf %28, %30 : vector<2x32xf32>
    %c2 = arith.constant 2 : index
    %32 = memref.load %arg0[%c2] : memref<17xf32, #tpu.memory_space<smem>>
    %33 = vector.broadcast %32 : f32 to vector<32xf32>
    %34 = arith.mulf %33, %2 : vector<32xf32>
    %c10 = arith.constant 10 : index
    %35 = memref.load %arg0[%c10] : memref<17xf32, #tpu.memory_space<smem>>
    %36 = vector.broadcast %35 : f32 to vector<32xf32>
    %37 = arith.mulf %36, %2 : vector<32xf32>
    %38 = vector.shape_cast %34 : vector<32xf32> to vector<1x32xf32>
    %39 = vector.shape_cast %37 : vector<32xf32> to vector<1x32xf32>
    %40 = tpu.concatenate %38, %39 in 0 : vector<1x32xf32>, vector<1x32xf32> -> vector<2x32xf32>
    %41 = vector.shape_cast %4 : vector<32xf32> to vector<1x32xf32>
    %42 = vector.broadcast %41 : vector<1x32xf32> to vector<2x32xf32>
    %43 = arith.addf %40, %42 : vector<2x32xf32>
    %c3 = arith.constant 3 : index
    %44 = memref.load %arg0[%c3] : memref<17xf32, #tpu.memory_space<smem>>
    %45 = vector.broadcast %44 : f32 to vector<32xf32>
    %46 = arith.mulf %45, %2 : vector<32xf32>
    %c11 = arith.constant 11 : index
    %47 = memref.load %arg0[%c11] : memref<17xf32, #tpu.memory_space<smem>>
    %48 = vector.broadcast %47 : f32 to vector<32xf32>
    %49 = arith.mulf %48, %2 : vector<32xf32>
    %50 = vector.shape_cast %46 : vector<32xf32> to vector<1x32xf32>
    %51 = vector.shape_cast %49 : vector<32xf32> to vector<1x32xf32>
    %52 = tpu.concatenate %50, %51 in 0 : vector<1x32xf32>, vector<1x32xf32> -> vector<2x32xf32>
    %53 = vector.shape_cast %4 : vector<32xf32> to vector<1x32xf32>
    %54 = vector.broadcast %53 : vector<1x32xf32> to vector<2x32xf32>
    %55 = arith.addf %52, %54 : vector<2x32xf32>
    %c4 = arith.constant 4 : index
    %56 = memref.load %arg0[%c4] : memref<17xf32, #tpu.memory_space<smem>>
    %57 = vector.broadcast %56 : f32 to vector<32xf32>
    %58 = arith.mulf %57, %2 : vector<32xf32>
    %c12 = arith.constant 12 : index
    %59 = memref.load %arg0[%c12] : memref<17xf32, #tpu.memory_space<smem>>
    %60 = vector.broadcast %59 : f32 to vector<32xf32>
    %61 = arith.mulf %60, %2 : vector<32xf32>
    %62 = vector.shape_cast %58 : vector<32xf32> to vector<1x32xf32>
    %63 = vector.shape_cast %61 : vector<32xf32> to vector<1x32xf32>
    %64 = tpu.concatenate %62, %63 in 0 : vector<1x32xf32>, vector<1x32xf32> -> vector<2x32xf32>
    %65 = vector.shape_cast %4 : vector<32xf32> to vector<1x32xf32>
    %66 = vector.broadcast %65 : vector<1x32xf32> to vector<2x32xf32>
    %67 = arith.addf %64, %66 : vector<2x32xf32>
    %c5 = arith.constant 5 : index
    %68 = memref.load %arg0[%c5] : memref<17xf32, #tpu.memory_space<smem>>
    %69 = vector.broadcast %68 : f32 to vector<32xf32>
    %70 = arith.mulf %69, %2 : vector<32xf32>
    %c13 = arith.constant 13 : index
    %71 = memref.load %arg0[%c13] : memref<17xf32, #tpu.memory_space<smem>>
    %72 = vector.broadcast %71 : f32 to vector<32xf32>
    %73 = arith.mulf %72, %2 : vector<32xf32>
    %74 = vector.shape_cast %70 : vector<32xf32> to vector<1x32xf32>
    %75 = vector.shape_cast %73 : vector<32xf32> to vector<1x32xf32>
    %76 = tpu.concatenate %74, %75 in 0 : vector<1x32xf32>, vector<1x32xf32> -> vector<2x32xf32>
    %77 = vector.shape_cast %4 : vector<32xf32> to vector<1x32xf32>
    %78 = vector.broadcast %77 : vector<1x32xf32> to vector<2x32xf32>
    %79 = arith.addf %76, %78 : vector<2x32xf32>
    %c6 = arith.constant 6 : index
    %80 = memref.load %arg0[%c6] : memref<17xf32, #tpu.memory_space<smem>>
    %81 = vector.broadcast %80 : f32 to vector<32xf32>
    %82 = arith.mulf %81, %2 : vector<32xf32>
    %c14 = arith.constant 14 : index
    %83 = memref.load %arg0[%c14] : memref<17xf32, #tpu.memory_space<smem>>
    %84 = vector.broadcast %83 : f32 to vector<32xf32>
    %85 = arith.mulf %84, %2 : vector<32xf32>
    %86 = vector.shape_cast %82 : vector<32xf32> to vector<1x32xf32>
    %87 = vector.shape_cast %85 : vector<32xf32> to vector<1x32xf32>
    %88 = tpu.concatenate %86, %87 in 0 : vector<1x32xf32>, vector<1x32xf32> -> vector<2x32xf32>
    %89 = vector.shape_cast %4 : vector<32xf32> to vector<1x32xf32>
    %90 = vector.broadcast %89 : vector<1x32xf32> to vector<2x32xf32>
    %91 = arith.addf %88, %90 : vector<2x32xf32>
    %c7 = arith.constant 7 : index
    %92 = memref.load %arg0[%c7] : memref<17xf32, #tpu.memory_space<smem>>
    %93 = vector.broadcast %92 : f32 to vector<32xf32>
    %94 = arith.mulf %93, %2 : vector<32xf32>
    %c15 = arith.constant 15 : index
    %95 = memref.load %arg0[%c15] : memref<17xf32, #tpu.memory_space<smem>>
    %96 = vector.broadcast %95 : f32 to vector<32xf32>
    %97 = arith.mulf %96, %2 : vector<32xf32>
    %98 = vector.shape_cast %94 : vector<32xf32> to vector<1x32xf32>
    %99 = vector.shape_cast %97 : vector<32xf32> to vector<1x32xf32>
    %100 = tpu.concatenate %98, %99 in 0 : vector<1x32xf32>, vector<1x32xf32> -> vector<2x32xf32>
    %101 = vector.shape_cast %4 : vector<32xf32> to vector<1x32xf32>
    %102 = vector.broadcast %101 : vector<1x32xf32> to vector<2x32xf32>
    %103 = arith.addf %100, %102 : vector<2x32xf32>
    %c0_2 = arith.constant 0 : index
    %c0_3 = arith.constant 0 : index
    %104 = vector.load %arg2[%c0_2, %c0_3] : memref<32x32xf32, #tpu.memory_space<vmem>>, vector<32x32xf32>
    %c0_4 = arith.constant 0 : index
    %c0_5 = arith.constant 0 : index
    %105 = vector.load %arg1[%c0_4, %c0_5] : memref<2x32xf32, #tpu.memory_space<vmem>>, vector<2x32xf32>
    %cst = arith.constant dense<0.000000e+00> : vector<2x32xf32>
    %106 = tpu.matmul %105, %104, %cst {dimension_numbers = #tpu.dot_dimension_numbers<[1], [0], [0], [1], [0, 0, 1, 1], [], []>} : vector<2x32xf32>, vector<32x32xf32>, vector<2x32xf32> -> vector<2x32xf32>
    %107 = arith.addf %19, %106 : vector<2x32xf32>
    %108 = math.tanh %107 : vector<2x32xf32>
    %cst_6 = arith.constant dense<0.000000e+00> : vector<2x32xf32>
    %109 = tpu.matmul %108, %104, %cst_6 {dimension_numbers = #tpu.dot_dimension_numbers<[1], [0], [0], [1], [0, 0, 1, 1], [], []>} : vector<2x32xf32>, vector<32x32xf32>, vector<2x32xf32> -> vector<2x32xf32>
    %110 = arith.addf %31, %109 : vector<2x32xf32>
    %111 = math.tanh %110 : vector<2x32xf32>
    %cst_7 = arith.constant dense<0.000000e+00> : vector<2x32xf32>
    %112 = tpu.matmul %111, %104, %cst_7 {dimension_numbers = #tpu.dot_dimension_numbers<[1], [0], [0], [1], [0, 0, 1, 1], [], []>} : vector<2x32xf32>, vector<32x32xf32>, vector<2x32xf32> -> vector<2x32xf32>
    %113 = arith.addf %43, %112 : vector<2x32xf32>
    %114 = math.tanh %113 : vector<2x32xf32>
    %cst_8 = arith.constant dense<0.000000e+00> : vector<2x32xf32>
    %115 = tpu.matmul %114, %104, %cst_8 {dimension_numbers = #tpu.dot_dimension_numbers<[1], [0], [0], [1], [0, 0, 1, 1], [], []>} : vector<2x32xf32>, vector<32x32xf32>, vector<2x32xf32> -> vector<2x32xf32>
    %116 = arith.addf %55, %115 : vector<2x32xf32>
    %117 = math.tanh %116 : vector<2x32xf32>
    %cst_9 = arith.constant dense<0.000000e+00> : vector<2x32xf32>
    %118 = tpu.matmul %117, %104, %cst_9 {dimension_numbers = #tpu.dot_dimension_numbers<[1], [0], [0], [1], [0, 0, 1, 1], [], []>} : vector<2x32xf32>, vector<32x32xf32>, vector<2x32xf32> -> vector<2x32xf32>
    %119 = arith.addf %67, %118 : vector<2x32xf32>
    %120 = math.tanh %119 : vector<2x32xf32>
    %cst_10 = arith.constant dense<0.000000e+00> : vector<2x32xf32>
    %121 = tpu.matmul %120, %104, %cst_10 {dimension_numbers = #tpu.dot_dimension_numbers<[1], [0], [0], [1], [0, 0, 1, 1], [], []>} : vector<2x32xf32>, vector<32x32xf32>, vector<2x32xf32> -> vector<2x32xf32>
    %122 = arith.addf %79, %121 : vector<2x32xf32>
    %123 = math.tanh %122 : vector<2x32xf32>
    %cst_11 = arith.constant dense<0.000000e+00> : vector<2x32xf32>
    %124 = tpu.matmul %123, %104, %cst_11 {dimension_numbers = #tpu.dot_dimension_numbers<[1], [0], [0], [1], [0, 0, 1, 1], [], []>} : vector<2x32xf32>, vector<32x32xf32>, vector<2x32xf32> -> vector<2x32xf32>
    %125 = arith.addf %91, %124 : vector<2x32xf32>
    %126 = math.tanh %125 : vector<2x32xf32>
    %cst_12 = arith.constant dense<0.000000e+00> : vector<2x32xf32>
    %127 = tpu.matmul %126, %104, %cst_12 {dimension_numbers = #tpu.dot_dimension_numbers<[1], [0], [0], [1], [0, 0, 1, 1], [], []>} : vector<2x32xf32>, vector<32x32xf32>, vector<2x32xf32> -> vector<2x32xf32>
    %128 = arith.addf %103, %127 : vector<2x32xf32>
    %129 = math.tanh %128 : vector<2x32xf32>
    %c0_13 = arith.constant 0 : index
    %c0_14 = arith.constant 0 : index
    %130 = vector.load %arg5[%c0_13, %c0_14] : memref<2x32xf32, #tpu.memory_space<vmem>>, vector<2x32xf32>
    tpu.vector_store %arg5[%c0_13, %c0_14], %129 {strides = array<i32>} : memref<2x32xf32, #tpu.memory_space<vmem>>, vector<2x32xf32>,
    %131 = vector.shape_cast %108 : vector<2x32xf32> to vector<2x1x32xf32>
    %132 = vector.shape_cast %111 : vector<2x32xf32> to vector<2x1x32xf32>
    %133 = vector.shape_cast %114 : vector<2x32xf32> to vector<2x1x32xf32>
    %134 = vector.shape_cast %117 : vector<2x32xf32> to vector<2x1x32xf32>
    %135 = vector.shape_cast %120 : vector<2x32xf32> to vector<2x1x32xf32>
    %136 = vector.shape_cast %123 : vector<2x32xf32> to vector<2x1x32xf32>
    %137 = vector.shape_cast %126 : vector<2x32xf32> to vector<2x1x32xf32>
    %138 = vector.shape_cast %129 : vector<2x32xf32> to vector<2x1x32xf32>
    %139 = tpu.concatenate %131, %132, %133, %134, %135, %136, %137, %138 in 1 : vector<2x1x32xf32>, vector<2x1x32xf32>, vector<2x1x32xf32>, vector<2x1x32xf32>, vector<2x1x32xf32>, vector<2x1x32xf32>, vector<2x1x32xf32>, vector<2x1x32xf32> -> vector<2x8x32xf32>
    %140 = vector.shape_cast %6 : vector<32xf32> to vector<1x1x32xf32>
    %141 = vector.broadcast %140 : vector<1x1x32xf32> to vector<2x8x32xf32>
    %142 = arith.mulf %139, %141 : vector<2x8x32xf32>
    %cst_15 = arith.constant dense<0.000000e+00> : vector<2x8xf32>
    %143 = vector.multi_reduction <add>, %142, %cst_15 [2] : vector<2x8x32xf32> to vector<2x8xf32>
    %144 = vector.broadcast %7 : f32 to vector<2x8xf32>
    %145 = arith.addf %143, %144 : vector<2x8xf32>
    %c0_16 = arith.constant 0 : index
    %c0_17 = arith.constant 0 : index
    %146 = vector.load %arg4[%c0_16, %c0_17] : memref<2x8xf32, #tpu.memory_space<vmem>>, vector<2x8xf32>
    tpu.vector_store %arg4[%c0_16, %c0_17], %145 {strides = array<i32>} : memref<2x8xf32, #tpu.memory_space<vmem>>, vector<2x8xf32>,
    return
  }
}

</mosaic_0001>

<llo_original>
// kernel: rnn_forward.1
$region0: #{rnn_forward.1}
  #allocation0 [shape = 'u32[]', space=smem, size = 0x4, offset = 0x4, fixed_abs, tag = 'smem constant byte address 0x4 - core index']
  #allocation1 [shape = 'u32[144,128]{1,0:T(1,128)}', space=vmem, size = 0x12000, scoped, tag = 'internal scratch']
  %s0 = inlined_call_operand.vmem [shape: f32[17], index: 0, kind: input, shape index: {}]
  %s1 = inlined_call_operand.vmem [shape: f32[2,32], index: 1, kind: input, shape index: {}]
  %s2 = inlined_call_operand.vmem [shape: f32[32,32], index: 2, kind: input, shape index: {}]
  %s3 = inlined_call_operand.vmem [shape: f32[3,32], index: 3, kind: input, shape index: {}]
  %s4 = inlined_call_operand.hbm [shape: f32[2,8], index: 4, kind: output, shape index: {0}]
  %s5 = inlined_call_operand.hbm [shape: f32[2,32], index: 5, kind: output, shape index: {1}]
  %6 = xla_tuple %s4, %s5
  %s7 = sld [smem:[#allocation0]]
  $region38: #{rnn_forward.1} parent=0
    _
  %s9 = ssub.s32 1, %s7
  %s10 = scalar_select 0, %s9, %s7
  $region1: #{rnn_forward.1} parent=0
    #allocation2 [shape = 'u8[512]{0}', space=smem, size = 0x200, scoped, tag = 'input window, operand 0, single buffered']
    #allocation3 [shape = 's32[1]{0}', space=sflag, size = 0x4, scoped, tag = 'scoped memory for rnn_forward.1']
    #allocation4 [shape = 's32[1]{0}', space=sflag, size = 0x4, scoped, tag = 'scoped memory for rnn_forward.1']
    #allocation5 [shape = 'u8[1024]{0}', space=vmem, size = 0x400, scoped, tag = 'output window, operand 0, single buffered']
    #allocation6 [shape = 'u8[1024]{0}', space=vmem, size = 0x400, scoped, tag = 'output window, operand 1, single buffered']
    #allocation7 [shape = 's32[1]{0}', space=sflag, size = 0x4, scoped, tag = 'scoped memory for rnn_forward.1']
    %11 = vsyncpa [#allocation4], 0
    %12 = vsyncpa [#allocation3], 0
    %13 = vsyncpa [#allocation7], 0
    // Predicated region
    $region2: #{rnn_forward.1} parent=1 // pred_check
      _
    $region3: #{rnn_forward.1} parent=1 // pred_check_branch
      %15 = sbr.rel (0) target = $region5
    $region4: #{rnn_forward.1} parent=1 // pred_region
      %s17 = ssub.s32 16, 16
      %18 = vsyncadd [#allocation4], %s17
      %s20 = sshll.u32 %s0, 4
      %s21 = int_to_ptr.vmem [resolvable:$true] %s20
      %23 = dma.vmem_to_smem %s21, 16, [#allocation2], [#allocation4]
    $region5: #{rnn_forward.1} parent=1 // pred_fallthru
      _
    // Predicated region
    $region6: #{rnn_forward.1} parent=1 // pred_check
      _
    $region7: #{rnn_forward.1} parent=1 // pred_check_branch
      %25 = sbr.rel (0) target = $region9
    $region8: #{rnn_forward.1} parent=1 // pred_region
      _
    $region9: #{rnn_forward.1} parent=1 // pred_fallthru
      _
    // Predicated region
    $region10: #{rnn_forward.1} parent=1 // pred_check
      _
    $region11: #{rnn_forward.1} parent=1 // pred_check_branch
      %27 = sbr.rel (0) target = $region13
    $region12: #{rnn_forward.1} parent=1 // pred_region
      _
    $region13: #{rnn_forward.1} parent=1 // pred_fallthru
      _
    // Predicated region
    $region14: #{rnn_forward.1} parent=1 // pred_check
      _
    $region15: #{rnn_forward.1} parent=1 // pred_check_branch
      %29 = sbr.rel (0) target = $region17
    $region16: #{rnn_forward.1} parent=1 // pred_region
      _
    $region17: #{rnn_forward.1} parent=1 // pred_fallthru
      _
    // Predicated region
    $region18: #{rnn_forward.1} parent=1 // pred_check
      _
    $region19: #{rnn_forward.1} parent=1 // pred_check_branch
      %31 = sbr.rel (0) target = $region21
    $region20: #{rnn_forward.1} parent=1 // pred_region
      %32 = dma.done [#allocation4], 16
    $region21: #{rnn_forward.1} parent=1 // pred_fallthru
      _
    %33 = sfence
    %v34 = vld [vmem:[%s3] sm:$0x7]
    %s35 = sld [smem:[#allocation2 + $0x10]]
    %s36 = sld [smem:[#allocation2]]
    %v37 = vstv %s36
    %v38 = vmul.f32 %v37, %v34
    %s39 = sld [smem:[#allocation2 + $0x8]]
    %v40 = vstv %s39
    %v41 = vmul.f32 %v40, %v34
    %v43 = vrot.slane %v41, 7
    %vm45 = vcmask 1040384
    %v46 = vsel %vm45, %v38, %v43
    %v47 = vlaneseq
    %v48 = vshrl.u32 %v47, 7
    %v49 = vsub.s32 1, %v48
    %v50 = vrot.slane %v34, %v49
    %v51 = vadd.f32 %v46, %v50
    %s52 = sld [smem:[#allocation2 + $0x1]]
    %v53 = vstv %s52
    %v54 = vmul.f32 %v53, %v34
    %s55 = sld [smem:[#allocation2 + $0x9]]
    %v56 = vstv %s55
    %v57 = vmul.f32 %v56, %v34
    %v59 = vrot.slane %v57, 7
    %v61 = vsel %vm45, %v54, %v59
    %v62 = vadd.f32 %v61, %v50
    %s63 = sld [smem:[#allocation2 + $0x2]]
    %v64 = vstv %s63
    %v65 = vmul.f32 %v64, %v34
    %s66 = sld [smem:[#allocation2 + $0xa]]
    %v67 = vstv %s66
    %v68 = vmul.f32 %v67, %v34
    %v70 = vrot.slane %v68, 7
    %v72 = vsel %vm45, %v65, %v70
    %v73 = vadd.f32 %v72, %v50
    %s74 = sld [smem:[#allocation2 + $0x3]]
    %v75 = vstv %s74
    %v76 = vmul.f32 %v75, %v34
    %s77 = sld [smem:[#allocation2 + $0xb]]
    %v78 = vstv %s77
    %v79 = vmul.f32 %v78, %v34
    %v81 = vrot.slane %v79, 7
    %v83 = vsel %vm45, %v76, %v81
    %v84 = vadd.f32 %v83, %v50
    %s85 = sld [smem:[#allocation2 + $0x4]]
    %v86 = vstv %s85
    %v87 = vmul.f32 %v86, %v34
    %s88 = sld [smem:[#allocation2 + $0xc]]
    %v89 = vstv %s88
    %v90 = vmul.f32 %v89, %v34
    %v92 = vrot.slane %v90, 7
    %v94 = vsel %vm45, %v87, %v92
    %v95 = vadd.f32 %v94, %v50
    %s96 = sld [smem:[#allocation2 + $0x5]]
    %v97 = vstv %s96
    %v98 = vmul.f32 %v97, %v34
    %s99 = sld [smem:[#allocation2 + $0xd]]
    %v100 = vstv %s99
    %v101 = vmul.f32 %v100, %v34
    %v103 = vrot.slane %v101, 7
    %v105 = vsel %vm45, %v98, %v103
    %v106 = vadd.f32 %v105, %v50
    %s107 = sld [smem:[#allocation2 + $0x6]]
    %v108 = vstv %s107
    %v109 = vmul.f32 %v108, %v34
    %s110 = sld [smem:[#allocation2 + $0xe]]
    %v111 = vstv %s110
    %v112 = vmul.f32 %v111, %v34
    %v114 = vrot.slane %v112, 7
    %v116 = vsel %vm45, %v109, %v114
    %v117 = vadd.f32 %v116, %v50
    %s118 = sld [smem:[#allocation2 + $0x7]]
    %v119 = vstv %s118
    %v120 = vmul.f32 %v119, %v34
    %s121 = sld [smem:[#allocation2 + $0xf]]
    %v122 = vstv %s121
    %v123 = vmul.f32 %v122, %v34
    %v125 = vrot.slane %v123, 7
    %v127 = vsel %vm45, %v120, %v125
    %v128 = vadd.f32 %v127, %v50
    %v129 = vld [vmem:[%s2] sm:$0xff]
    %v130 = vld [vmem:[%s2 + $0x8] sm:$0xff]
    %v131 = vld [vmem:[%s2 + $0x10] sm:$0xff]
    %v132 = vld [vmem:[%s2 + $0x18] sm:$0xff]
    %v133 = vld [vmem:[%s1] sm:$0x3]
    %vm134 = vcmask 261120
    %v136 = vsel %vm134, %v133, 0
    %138 = vmatprep.subr.mxu0 0.0
    %139 = vmatpush1.msra.mxu0 %v129
    %140 = vmatprep.subr.mxu0 0.0
    %141 = vmatpush1.msra.mxu0 %v130
    %142 = vmatprep.subr.mxu0 0.0
    %143 = vmatpush1.msra.mxu0 %v131
    %144 = vmatprep.subr.mxu0 0.0
    %145 = vmatpush1.msra.mxu0 %v132
    %146 = vmatprep.subr.mxu0 0.0
    %147 = vmatpush1.msra.mxu0 0.0
    %148 = vmatprep.subr.mxu0 0.0
    %149 = vmatpush1.msra.mxu0 0.0
    %150 = vmatprep.subr.mxu0 0.0
    %151 = vmatpush1.msra.mxu0 0.0
    %152 = vmatprep.subr.mxu0 0.0
    %153 = vmatpush1.msra.mxu0 0.0
    %154 = vmatprep.subr.mxu0 0.0
    %155 = vmatpush1.msra.mxu0 0.0
    %156 = vmatprep.subr.mxu0 0.0
    %157 = vmatpush1.msra.mxu0 0.0
    %158 = vmatprep.subr.mxu0 0.0
    %159 = vmatpush1.msra.mxu0 0.0
    %160 = vmatprep.subr.mxu0 0.0
    %161 = vmatpush1.msra.mxu0 0.0
    %162 = vmatprep.subr.mxu0 0.0
    %163 = vmatpush1.msra.mxu0 0.0
    %164 = vmatprep.subr.mxu0 0.0
    %165 = vmatpush1.msra.mxu0 0.0
    %166 = vmatprep.subr.mxu0 0.0
    %167 = vmatpush1.msra.mxu0 0.0
    %168 = vmatprep.subr.mxu0 0.0
    %169 = vmatpush1.msra.mxu0 0.0
    %170 = vmatprep.subr.mxu0 0.0
    %171 = vmatpush1.msra.mxu0 0.0
    %172 = vmatprep.subr.mxu0 0.0
    %173 = vmatpush1.msra.mxu0 0.0
    %174 = vmatprep.subr.mxu0 0.0
    %175 = vmatpush1.msra.mxu0 0.0
    %176 = vmatprep.subr.mxu0 0.0
    %177 = vmatpush1.msra.mxu0 0.0
    %178 = vmatprep.subr.mxu0 0.0
    %179 = vmatpush1.msra.mxu0 0.0
    %180 = vmatprep.subr.mxu0 0.0
    %181 = vmatpush1.msra.mxu0 0.0
    %182 = vmatprep.subr.mxu0 0.0
    %183 = vmatpush1.msra.mxu0 0.0
    %184 = vmatprep.subr.mxu0 0.0
    %185 = vmatpush1.msra.mxu0 0.0
    %186 = vmatprep.subr.mxu0 0.0
    %187 = vmatpush1.msra.mxu0 0.0
    %188 = vmatprep.subr.mxu0 0.0
    %189 = vmatpush1.msra.mxu0 0.0
    %190 = vmatprep.subr.mxu0 0.0
    %191 = vmatpush1.msra.mxu0 0.0
    %192 = vmatprep.subr.mxu0 0.0
    %193 = vmatpush1.msra.mxu0 0.0
    %194 = vmatprep.subr.mxu0 0.0
    %195 = vmatpush1.msra.mxu0 0.0
    %196 = vmatprep.subr.mxu0 0.0
    %197 = vmatpush1.msra.mxu0 0.0
    %198 = vmatprep.subr.mxu0 0.0
    %199 = vmatpush1.msra.mxu0 0.0
    %200 = vmatprep.subr.mxu0 0.0
    %201 = vmatpush1.msra.mxu0 0.0
    %202 = vmatprep.mubr.f32.mxu0 0.0
    %203 = vmatmul.mubr.f32.gmra.mrb[0].mxu0 %v136
    %v204 = vpop.f32.mrb[0].mxu0
    %v205 = vadd.f32 0.0, %v204
    %v206 = vpop.f32.mrb[0].mxu0
    %207 = vdwg.mxu0
    %v208 = vadd.f32 %v51, %v205
    %v209 = vtanh.pop %v208
    %v211 = vsel %vm134, %v209, 0
    %213 = vmatprep.subr.mxu0 0.0
    %214 = vmatpush1.msra.mxu0 %v129
    %215 = vmatprep.subr.mxu0 0.0
    %216 = vmatpush1.msra.mxu0 %v130
    %217 = vmatprep.subr.mxu0 0.0
    %218 = vmatpush1.msra.mxu0 %v131
    %219 = vmatprep.subr.mxu0 0.0
    %220 = vmatpush1.msra.mxu0 %v132
    %221 = vmatprep.subr.mxu0 0.0
    %222 = vmatpush1.msra.mxu0 0.0
    %223 = vmatprep.subr.mxu0 0.0
    %224 = vmatpush1.msra.mxu0 0.0
    %225 = vmatprep.subr.mxu0 0.0
    %226 = vmatpush1.msra.mxu0 0.0
    %227 = vmatprep.subr.mxu0 0.0
    %228 = vmatpush1.msra.mxu0 0.0
    %229 = vmatprep.subr.mxu0 0.0
    %230 = vmatpush1.msra.mxu0 0.0
    %231 = vmatprep.subr.mxu0 0.0
    %232 = vmatpush1.msra.mxu0 0.0
    %233 = vmatprep.subr.mxu0 0.0
    %234 = vmatpush1.msra.mxu0 0.0
    %235 = vmatprep.subr.mxu0 0.0
    %236 = vmatpush1.msra.mxu0 0.0
    %237 = vmatprep.subr.mxu0 0.0
    %238 = vmatpush1.msra.mxu0 0.0
    %239 = vmatprep.subr.mxu0 0.0
    %240 = vmatpush1.msra.mxu0 0.0
    %241 = vmatprep.subr.mxu0 0.0
    %242 = vmatpush1.msra.mxu0 0.0
    %243 = vmatprep.subr.mxu0 0.0
    %244 = vmatpush1.msra.mxu0 0.0
    %245 = vmatprep.subr.mxu0 0.0
    %246 = vmatpush1.msra.mxu0 0.0
    %247 = vmatprep.subr.mxu0 0.0
    %248 = vmatpush1.msra.mxu0 0.0
    %249 = vmatprep.subr.mxu0 0.0
    %250 = vmatpush1.msra.mxu0 0.0
    %251 = vmatprep.subr.mxu0 0.0
    %252 = vmatpush1.msra.mxu0 0.0
    %253 = vmatprep.subr.mxu0 0.0
    %254 = vmatpush1.msra.mxu0 0.0
    %255 = vmatprep.subr.mxu0 0.0
    %256 = vmatpush1.msra.mxu0 0.0
    %257 = vmatprep.subr.mxu0 0.0
    %258 = vmatpush1.msra.mxu0 0.0
    %259 = vmatprep.subr.mxu0 0.0
    %260 = vmatpush1.msra.mxu0 0.0
    %261 = vmatprep.subr.mxu0 0.0
    %262 = vmatpush1.msra.mxu0 0.0
    %263 = vmatprep.subr.mxu0 0.0
    %264 = vmatpush1.msra.mxu0 0.0
    %265 = vmatprep.subr.mxu0 0.0
    %266 = vmatpush1.msra.mxu0 0.0
    %267 = vmatprep.subr.mxu0 0.0
    %268 = vmatpush1.msra.mxu0 0.0
    %269 = vmatprep.subr.mxu0 0.0
    %270 = vmatpush1.msra.mxu0 0.0
    %271 = vmatprep.subr.mxu0 0.0
    %272 = vmatpush1.msra.mxu0 0.0
    %273 = vmatprep.subr.mxu0 0.0
    %274 = vmatpush1.msra.mxu0 0.0
    %275 = vmatprep.subr.mxu0 0.0
    %276 = vmatpush1.msra.mxu0 0.0
    %277 = vmatprep.mubr.f32.mxu0 0.0
    %278 = vmatmul.mubr.f32.gmra.mrb[0].mxu0 %v211
    %v279 = vpop.f32.mrb[0].mxu0
    %v280 = vadd.f32 0.0, %v279
    %v281 = vpop.f32.mrb[0].mxu0
    %282 = vdwg.mxu0
    %v283 = vadd.f32 %v62, %v280
    %v284 = vtanh.pop %v283
    %v286 = vsel %vm134, %v284, 0
    %288 = vmatprep.subr.mxu0 0.0
    %289 = vmatpush1.msra.mxu0 %v129
    %290 = vmatprep.subr.mxu0 0.0
    %291 = vmatpush1.msra.mxu0 %v130
    %292 = vmatprep.subr.mxu0 0.0
    %293 = vmatpush1.msra.mxu0 %v131
    %294 = vmatprep.subr.mxu0 0.0
    %295 = vmatpush1.msra.mxu0 %v132
    %296 = vmatprep.subr.mxu0 0.0
    %297 = vmatpush1.msra.mxu0 0.0
    %298 = vmatprep.subr.mxu0 0.0
    %299 = vmatpush1.msra.mxu0 0.0
    %300 = vmatprep.subr.mxu0 0.0
    %301 = vmatpush1.msra.mxu0 0.0
    %302 = vmatprep.subr.mxu0 0.0
    %303 = vmatpush1.msra.mxu0 0.0
    %304 = vmatprep.subr.mxu0 0.0
    %305 = vmatpush1.msra.mxu0 0.0
    %306 = vmatprep.subr.mxu0 0.0
    %307 = vmatpush1.msra.mxu0 0.0
    %308 = vmatprep.subr.mxu0 0.0
    %309 = vmatpush1.msra.mxu0 0.0
    %310 = vmatprep.subr.mxu0 0.0
    %311 = vmatpush1.msra.mxu0 0.0
    %312 = vmatprep.subr.mxu0 0.0
    %313 = vmatpush1.msra.mxu0 0.0
    %314 = vmatprep.subr.mxu0 0.0
    %315 = vmatpush1.msra.mxu0 0.0
    %316 = vmatprep.subr.mxu0 0.0
    %317 = vmatpush1.msra.mxu0 0.0
    %318 = vmatprep.subr.mxu0 0.0
    %319 = vmatpush1.msra.mxu0 0.0
    %320 = vmatprep.subr.mxu0 0.0
    %321 = vmatpush1.msra.mxu0 0.0
    %322 = vmatprep.subr.mxu0 0.0
    %323 = vmatpush1.msra.mxu0 0.0
    %324 = vmatprep.subr.mxu0 0.0
    %325 = vmatpush1.msra.mxu0 0.0
    %326 = vmatprep.subr.mxu0 0.0
    %327 = vmatpush1.msra.mxu0 0.0
    %328 = vmatprep.subr.mxu0 0.0
    %329 = vmatpush1.msra.mxu0 0.0
    %330 = vmatprep.subr.mxu0 0.0
    %331 = vmatpush1.msra.mxu0 0.0
    %332 = vmatprep.subr.mxu0 0.0
    %333 = vmatpush1.msra.mxu0 0.0
    %334 = vmatprep.subr.mxu0 0.0
    %335 = vmatpush1.msra.mxu0 0.0
    %336 = vmatprep.subr.mxu0 0.0
    %337 = vmatpush1.msra.mxu0 0.0
    %338 = vmatprep.subr.mxu0 0.0
    %339 = vmatpush1.msra.mxu0 0.0
    %340 = vmatprep.subr.mxu0 0.0
    %341 = vmatpush1.msra.mxu0 0.0
    %342 = vmatprep.subr.mxu0 0.0
    %343 = vmatpush1.msra.mxu0 0.0
    %344 = vmatprep.subr.mxu0 0.0
    %345 = vmatpush1.msra.mxu0 0.0
    %346 = vmatprep.subr.mxu0 0.0
    %347 = vmatpush1.msra.mxu0 0.0
    %348 = vmatprep.subr.mxu0 0.0
    %349 = vmatpush1.msra.mxu0 0.0
    %350 = vmatprep.subr.mxu0 0.0
    %351 = vmatpush1.msra.mxu0 0.0
    %352 = vmatprep.mubr.f32.mxu0 0.0
    %353 = vmatmul.mubr.f32.gmra.mrb[0].mxu0 %v286
    %v354 = vpop.f32.mrb[0].mxu0
    %v355 = vadd.f32 0.0, %v354
    %v356 = vpop.f32.mrb[0].mxu0
    %357 = vdwg.mxu0
    %v358 = vadd.f32 %v73, %v355
    %v359 = vtanh.pop %v358
    %v361 = vsel %vm134, %v359, 0
    %363 = vmatprep.subr.mxu0 0.0
    %364 = vmatpush1.msra.mxu0 %v129
    %365 = vmatprep.subr.mxu0 0.0
    %366 = vmatpush1.msra.mxu0 %v130
    %367 = vmatprep.subr.mxu0 0.0
    %368 = vmatpush1.msra.mxu0 %v131
    %369 = vmatprep.subr.mxu0 0.0
    %370 = vmatpush1.msra.mxu0 %v132
    %371 = vmatprep.subr.mxu0 0.0
    %372 = vmatpush1.msra.mxu0 0.0
    %373 = vmatprep.subr.mxu0 0.0
    %374 = vmatpush1.msra.mxu0 0.0
    %375 = vmatprep.subr.mxu0 0.0
    %376 = vmatpush1.msra.mxu0 0.0
    %377 = vmatprep.subr.mxu0 0.0
    %378 = vmatpush1.msra.mxu0 0.0
    %379 = vmatprep.subr.mxu0 0.0
    %380 = vmatpush1.msra.mxu0 0.0
    %381 = vmatprep.subr.mxu0 0.0
    %382 = vmatpush1.msra.mxu0 0.0
    %383 = vmatprep.subr.mxu0 0.0
    %384 = vmatpush1.msra.mxu0 0.0
    %385 = vmatprep.subr.mxu0 0.0
    %386 = vmatpush1.msra.mxu0 0.0
    %387 = vmatprep.subr.mxu0 0.0
    %388 = vmatpush1.msra.mxu0 0.0
    %389 = vmatprep.subr.mxu0 0.0
    %390 = vmatpush1.msra.mxu0 0.0
    %391 = vmatprep.subr.mxu0 0.0
    %392 = vmatpush1.msra.mxu0 0.0
    %393 = vmatprep.subr.mxu0 0.0
    %394 = vmatpush1.msra.mxu0 0.0
    %395 = vmatprep.subr.mxu0 0.0
    %396 = vmatpush1.msra.mxu0 0.0
    %397 = vmatprep.subr.mxu0 0.0
    %398 = vmatpush1.msra.mxu0 0.0
    %399 = vmatprep.subr.mxu0 0.0
    %400 = vmatpush1.msra.mxu0 0.0
    %401 = vmatprep.subr.mxu0 0.0
    %402 = vmatpush1.msra.mxu0 0.0
    %403 = vmatprep.subr.mxu0 0.0
    %404 = vmatpush1.msra.mxu0 0.0
    %405 = vmatprep.subr.mxu0 0.0
    %406 = vmatpush1.msra.mxu0 0.0
    %407 = vmatprep.subr.mxu0 0.0
    %408 = vmatpush1.msra.mxu0 0.0
    %409 = vmatprep.subr.mxu0 0.0
    %410 = vmatpush1.msra.mxu0 0.0
    %411 = vmatprep.subr.mxu0 0.0
    %412 = vmatpush1.msra.mxu0 0.0
    %413 = vmatprep.subr.mxu0 0.0
    %414 = vmatpush1.msra.mxu0 0.0
    %415 = vmatprep.subr.mxu0 0.0
    %416 = vmatpush1.msra.mxu0 0.0
    %417 = vmatprep.subr.mxu0 0.0
    %418 = vmatpush1.msra.mxu0 0.0
    %419 = vmatprep.subr.mxu0 0.0
    %420 = vmatpush1.msra.mxu0 0.0
    %421 = vmatprep.subr.mxu0 0.0
    %422 = vmatpush1.msra.mxu0 0.0
    %423 = vmatprep.subr.mxu0 0.0
    %424 = vmatpush1.msra.mxu0 0.0
    %425 = vmatprep.subr.mxu0 0.0
    %426 = vmatpush1.msra.mxu0 0.0
    %427 = vmatprep.mubr.f32.mxu0 0.0
    %428 = vmatmul.mubr.f32.gmra.mrb[0].mxu0 %v361
    %v429 = vpop.f32.mrb[0].mxu0
    %v430 = vadd.f32 0.0, %v429
    %v431 = vpop.f32.mrb[0].mxu0
    %432 = vdwg.mxu0
    %v433 = vadd.f32 %v84, %v430
    %v434 = vtanh.pop %v433
    %v436 = vsel %vm134, %v434, 0
    %438 = vmatprep.subr.mxu0 0.0
    %439 = vmatpush1.msra.mxu0 %v129
    %440 = vmatprep.subr.mxu0 0.0
    %441 = vmatpush1.msra.mxu0 %v130
    %442 = vmatprep.subr.mxu0 0.0
    %443 = vmatpush1.msra.mxu0 %v131
    %444 = vmatprep.subr.mxu0 0.0
    %445 = vmatpush1.msra.mxu0 %v132
    %446 = vmatprep.subr.mxu0 0.0
    %447 = vmatpush1.msra.mxu0 0.0
    %448 = vmatprep.subr.mxu0 0.0
    %449 = vmatpush1.msra.mxu0 0.0
    %450 = vmatprep.subr.mxu0 0.0
    %451 = vmatpush1.msra.mxu0 0.0
    %452 = vmatprep.subr.mxu0 0.0
    %453 = vmatpush1.msra.mxu0 0.0
    %454 = vmatprep.subr.mxu0 0.0
    %455 = vmatpush1.msra.mxu0 0.0
    %456 = vmatprep.subr.mxu0 0.0
    %457 = vmatpush1.msra.mxu0 0.0
    %458 = vmatprep.subr.mxu0 0.0
    %459 = vmatpush1.msra.mxu0 0.0
    %460 = vmatprep.subr.mxu0 0.0
    %461 = vmatpush1.msra.mxu0 0.0
    %462 = vmatprep.subr.mxu0 0.0
    %463 = vmatpush1.msra.mxu0 0.0
    %464 = vmatprep.subr.mxu0 0.0
    %465 = vmatpush1.msra.mxu0 0.0
    %466 = vmatprep.subr.mxu0 0.0
    %467 = vmatpush1.msra.mxu0 0.0
    %468 = vmatprep.subr.mxu0 0.0
    %469 = vmatpush1.msra.mxu0 0.0
    %470 = vmatprep.subr.mxu0 0.0
    %471 = vmatpush1.msra.mxu0 0.0
    %472 = vmatprep.subr.mxu0 0.0
    %473 = vmatpush1.msra.mxu0 0.0
    %474 = vmatprep.subr.mxu0 0.0
    %475 = vmatpush1.msra.mxu0 0.0
    %476 = vmatprep.subr.mxu0 0.0
    %477 = vmatpush1.msra.mxu0 0.0
    %478 = vmatprep.subr.mxu0 0.0
    %479 = vmatpush1.msra.mxu0 0.0
    %480 = vmatprep.subr.mxu0 0.0
    %481 = vmatpush1.msra.mxu0 0.0
    %482 = vmatprep.subr.mxu0 0.0
    %483 = vmatpush1.msra.mxu0 0.0
    %484 = vmatprep.subr.mxu0 0.0
    %485 = vmatpush1.msra.mxu0 0.0
    %486 = vmatprep.subr.mxu0 0.0
    %487 = vmatpush1.msra.mxu0 0.0
    %488 = vmatprep.subr.mxu0 0.0
    %489 = vmatpush1.msra.mxu0 0.0
    %490 = vmatprep.subr.mxu0 0.0
    %491 = vmatpush1.msra.mxu0 0.0
    %492 = vmatprep.subr.mxu0 0.0
    %493 = vmatpush1.msra.mxu0 0.0
    %494 = vmatprep.subr.mxu0 0.0
    %495 = vmatpush1.msra.mxu0 0.0
    %496 = vmatprep.subr.mxu0 0.0
    %497 = vmatpush1.msra.mxu0 0.0
    %498 = vmatprep.subr.mxu0 0.0
    %499 = vmatpush1.msra.mxu0 0.0
    %500 = vmatprep.subr.mxu0 0.0
    %501 = vmatpush1.msra.mxu0 0.0
    %502 = vmatprep.mubr.f32.mxu0 0.0
    %503 = vmatmul.mubr.f32.gmra.mrb[0].mxu0 %v436
    %v504 = vpop.f32.mrb[0].mxu0
    %v505 = vadd.f32 0.0, %v504
    %v506 = vpop.f32.mrb[0].mxu0
    %507 = vdwg.mxu0
    %v508 = vadd.f32 %v95, %v505
    %v509 = vtanh.pop %v508
    %v511 = vsel %vm134, %v509, 0
    %513 = vmatprep.subr.mxu0 0.0
    %514 = vmatpush1.msra.mxu0 %v129
    %515 = vmatprep.subr.mxu0 0.0
    %516 = vmatpush1.msra.mxu0 %v130
    %517 = vmatprep.subr.mxu0 0.0
    %518 = vmatpush1.msra.mxu0 %v131
    %519 = vmatprep.subr.mxu0 0.0
    %520 = vmatpush1.msra.mxu0 %v132
    %521 = vmatprep.subr.mxu0 0.0
    %522 = vmatpush1.msra.mxu0 0.0
    %523 = vmatprep.subr.mxu0 0.0
    %524 = vmatpush1.msra.mxu0 0.0
    %525 = vmatprep.subr.mxu0 0.0
    %526 = vmatpush1.msra.mxu0 0.0
    %527 = vmatprep.subr.mxu0 0.0
    %528 = vmatpush1.msra.mxu0 0.0
    %529 = vmatprep.subr.mxu0 0.0
    %530 = vmatpush1.msra.mxu0 0.0
    %531 = vmatprep.subr.mxu0 0.0
    %532 = vmatpush1.msra.mxu0 0.0
    %533 = vmatprep.subr.mxu0 0.0
    %534 = vmatpush1.msra.mxu0 0.0
    %535 = vmatprep.subr.mxu0 0.0
    %536 = vmatpush1.msra.mxu0 0.0
    %537 = vmatprep.subr.mxu0 0.0
    %538 = vmatpush1.msra.mxu0 0.0
    %539 = vmatprep.subr.mxu0 0.0
    %540 = vmatpush1.msra.mxu0 0.0
    %541 = vmatprep.subr.mxu0 0.0
    %542 = vmatpush1.msra.mxu0 0.0
    %543 = vmatprep.subr.mxu0 0.0
    %544 = vmatpush1.msra.mxu0 0.0
    %545 = vmatprep.subr.mxu0 0.0
    %546 = vmatpush1.msra.mxu0 0.0
    %547 = vmatprep.subr.mxu0 0.0
    %548 = vmatpush1.msra.mxu0 0.0
    %549 = vmatprep.subr.mxu0 0.0
    %550 = vmatpush1.msra.mxu0 0.0
    %551 = vmatprep.subr.mxu0 0.0
    %552 = vmatpush1.msra.mxu0 0.0
    %553 = vmatprep.subr.mxu0 0.0
    %554 = vmatpush1.msra.mxu0 0.0
    %555 = vmatprep.subr.mxu0 0.0
    %556 = vmatpush1.msra.mxu0 0.0
    %557 = vmatprep.subr.mxu0 0.0
    %558 = vmatpush1.msra.mxu0 0.0
    %559 = vmatprep.subr.mxu0 0.0
    %560 = vmatpush1.msra.mxu0 0.0
    %561 = vmatprep.subr.mxu0 0.0
    %562 = vmatpush1.msra.mxu0 0.0
    %563 = vmatprep.subr.mxu0 0.0
    %564 = vmatpush1.msra.mxu0 0.0
    %565 = vmatprep.subr.mxu0 0.0
    %566 = vmatpush1.msra.mxu0 0.0
    %567 = vmatprep.subr.mxu0 0.0
    %568 = vmatpush1.msra.mxu0 0.0
    %569 = vmatprep.subr.mxu0 0.0
    %570 = vmatpush1.msra.mxu0 0.0
    %571 = vmatprep.subr.mxu0 0.0
    %572 = vmatpush1.msra.mxu0 0.0
    %573 = vmatprep.subr.mxu0 0.0
    %574 = vmatpush1.msra.mxu0 0.0
    %575 = vmatprep.subr.mxu0 0.0
    %576 = vmatpush1.msra.mxu0 0.0
    %577 = vmatprep.mubr.f32.mxu0 0.0
    %578 = vmatmul.mubr.f32.gmra.mrb[0].mxu0 %v511
    %v579 = vpop.f32.mrb[0].mxu0
    %v580 = vadd.f32 0.0, %v579
    %v581 = vpop.f32.mrb[0].mxu0
    %582 = vdwg.mxu0
    %v583 = vadd.f32 %v106, %v580
    %v584 = vtanh.pop %v583
    %v586 = vsel %vm134, %v584, 0
    %588 = vmatprep.subr.mxu0 0.0
    %589 = vmatpush1.msra.mxu0 %v129
    %590 = vmatprep.subr.mxu0 0.0
    %591 = vmatpush1.msra.mxu0 %v130
    %592 = vmatprep.subr.mxu0 0.0
    %593 = vmatpush1.msra.mxu0 %v131
    %594 = vmatprep.subr.mxu0 0.0
    %595 = vmatpush1.msra.mxu0 %v132
    %596 = vmatprep.subr.mxu0 0.0
    %597 = vmatpush1.msra.mxu0 0.0
    %598 = vmatprep.subr.mxu0 0.0
    %599 = vmatpush1.msra.mxu0 0.0
    %600 = vmatprep.subr.mxu0 0.0
    %601 = vmatpush1.msra.mxu0 0.0
    %602 = vmatprep.subr.mxu0 0.0
    %603 = vmatpush1.msra.mxu0 0.0
    %604 = vmatprep.subr.mxu0 0.0
    %605 = vmatpush1.msra.mxu0 0.0
    %606 = vmatprep.subr.mxu0 0.0
    %607 = vmatpush1.msra.mxu0 0.0
    %608 = vmatprep.subr.mxu0 0.0
    %609 = vmatpush1.msra.mxu0 0.0
    %610 = vmatprep.subr.mxu0 0.0
    %611 = vmatpush1.msra.mxu0 0.0
    %612 = vmatprep.subr.mxu0 0.0
    %613 = vmatpush1.msra.mxu0 0.0
    %614 = vmatprep.subr.mxu0 0.0
    %615 = vmatpush1.msra.mxu0 0.0
    %616 = vmatprep.subr.mxu0 0.0
    %617 = vmatpush1.msra.mxu0 0.0
    %618 = vmatprep.subr.mxu0 0.0
    %619 = vmatpush1.msra.mxu0 0.0
    %620 = vmatprep.subr.mxu0 0.0
    %621 = vmatpush1.msra.mxu0 0.0
    %622 = vmatprep.subr.mxu0 0.0
    %623 = vmatpush1.msra.mxu0 0.0
    %624 = vmatprep.subr.mxu0 0.0
    %625 = vmatpush1.msra.mxu0 0.0
    %626 = vmatprep.subr.mxu0 0.0
    %627 = vmatpush1.msra.mxu0 0.0
    %628 = vmatprep.subr.mxu0 0.0
    %629 = vmatpush1.msra.mxu0 0.0
    %630 = vmatprep.subr.mxu0 0.0
    %631 = vmatpush1.msra.mxu0 0.0
    %632 = vmatprep.subr.mxu0 0.0
    %633 = vmatpush1.msra.mxu0 0.0
    %634 = vmatprep.subr.mxu0 0.0
    %635 = vmatpush1.msra.mxu0 0.0
    %636 = vmatprep.subr.mxu0 0.0
    %637 = vmatpush1.msra.mxu0 0.0
    %638 = vmatprep.subr.mxu0 0.0
    %639 = vmatpush1.msra.mxu0 0.0
    %640 = vmatprep.subr.mxu0 0.0
    %641 = vmatpush1.msra.mxu0 0.0
    %642 = vmatprep.subr.mxu0 0.0
    %643 = vmatpush1.msra.mxu0 0.0
    %644 = vmatprep.subr.mxu0 0.0
    %645 = vmatpush1.msra.mxu0 0.0
    %646 = vmatprep.subr.mxu0 0.0
    %647 = vmatpush1.msra.mxu0 0.0
    %648 = vmatprep.subr.mxu0 0.0
    %649 = vmatpush1.msra.mxu0 0.0
    %650 = vmatprep.subr.mxu0 0.0
    %651 = vmatpush1.msra.mxu0 0.0
    %652 = vmatprep.mubr.f32.mxu0 0.0
    %653 = vmatmul.mubr.f32.gmra.mrb[0].mxu0 %v586
    %v654 = vpop.f32.mrb[0].mxu0
    %v655 = vadd.f32 0.0, %v654
    %v656 = vpop.f32.mrb[0].mxu0
    %657 = vdwg.mxu0
    %v658 = vadd.f32 %v117, %v655
    %v659 = vtanh.pop %v658
    %v661 = vsel %vm134, %v659, 0
    %663 = vmatprep.subr.mxu0 0.0
    %664 = vmatpush1.msra.mxu0 %v129
    %665 = vmatprep.subr.mxu0 0.0
    %666 = vmatpush1.msra.mxu0 %v130
    %667 = vmatprep.subr.mxu0 0.0
    %668 = vmatpush1.msra.mxu0 %v131
    %669 = vmatprep.subr.mxu0 0.0
    %670 = vmatpush1.msra.mxu0 %v132
    %671 = vmatprep.subr.mxu0 0.0
    %672 = vmatpush1.msra.mxu0 0.0
    %673 = vmatprep.subr.mxu0 0.0
    %674 = vmatpush1.msra.mxu0 0.0
    %675 = vmatprep.subr.mxu0 0.0
    %676 = vmatpush1.msra.mxu0 0.0
    %677 = vmatprep.subr.mxu0 0.0
    %678 = vmatpush1.msra.mxu0 0.0
    %679 = vmatprep.subr.mxu0 0.0
    %680 = vmatpush1.msra.mxu0 0.0
    %681 = vmatprep.subr.mxu0 0.0
    %682 = vmatpush1.msra.mxu0 0.0
    %683 = vmatprep.subr.mxu0 0.0
    %684 = vmatpush1.msra.mxu0 0.0
    %685 = vmatprep.subr.mxu0 0.0
    %686 = vmatpush1.msra.mxu0 0.0
    %687 = vmatprep.subr.mxu0 0.0
    %688 = vmatpush1.msra.mxu0 0.0
    %689 = vmatprep.subr.mxu0 0.0
    %690 = vmatpush1.msra.mxu0 0.0
    %691 = vmatprep.subr.mxu0 0.0
    %692 = vmatpush1.msra.mxu0 0.0
    %693 = vmatprep.subr.mxu0 0.0
    %694 = vmatpush1.msra.mxu0 0.0
    %695 = vmatprep.subr.mxu0 0.0
    %696 = vmatpush1.msra.mxu0 0.0
    %697 = vmatprep.subr.mxu0 0.0
    %698 = vmatpush1.msra.mxu0 0.0
    %699 = vmatprep.subr.mxu0 0.0
    %700 = vmatpush1.msra.mxu0 0.0
    %701 = vmatprep.subr.mxu0 0.0
    %702 = vmatpush1.msra.mxu0 0.0
    %703 = vmatprep.subr.mxu0 0.0
    %704 = vmatpush1.msra.mxu0 0.0
    %705 = vmatprep.subr.mxu0 0.0
    %706 = vmatpush1.msra.mxu0 0.0
    %707 = vmatprep.subr.mxu0 0.0
    %708 = vmatpush1.msra.mxu0 0.0
    %709 = vmatprep.subr.mxu0 0.0
    %710 = vmatpush1.msra.mxu0 0.0
    %711 = vmatprep.subr.mxu0 0.0
    %712 = vmatpush1.msra.mxu0 0.0
    %713 = vmatprep.subr.mxu0 0.0
    %714 = vmatpush1.msra.mxu0 0.0
    %715 = vmatprep.subr.mxu0 0.0
    %716 = vmatpush1.msra.mxu0 0.0
    %717 = vmatprep.subr.mxu0 0.0
    %718 = vmatpush1.msra.mxu0 0.0
    %719 = vmatprep.subr.mxu0 0.0
    %720 = vmatpush1.msra.mxu0 0.0
    %721 = vmatprep.subr.mxu0 0.0
    %722 = vmatpush1.msra.mxu0 0.0
    %723 = vmatprep.subr.mxu0 0.0
    %724 = vmatpush1.msra.mxu0 0.0
    %725 = vmatprep.subr.mxu0 0.0
    %726 = vmatpush1.msra.mxu0 0.0
    %727 = vmatprep.mubr.f32.mxu0 0.0
    %728 = vmatmul.mubr.f32.gmra.mrb[0].mxu0 %v661
    %v729 = vpop.f32.mrb[0].mxu0
    %v730 = vadd.f32 0.0, %v729
    %v731 = vpop.f32.mrb[0].mxu0
    %732 = vdwg.mxu0
    %v733 = vadd.f32 %v128, %v730
    %v734 = vtanh.pop %v733
    %vm735 = vcmask 254976
    %736 = vst.msk [vmem:[#allocation6] sm:$0x3] %vm735, %v734
    %v738 = vunpack.c.l.s4 1966171168
    %v739 = vunpack.c.0.s8 %v738
    %v740 = vlaneseq
    %v741 = vshrl.u32 %v740, 7
    %v742 = vsub.s32 %v739, %v741
    %v743 = vrot.slane %v209, %v742
    %v744 = vcombine.high %v743, %v743
    %v746 = vunpack.c.l.s4 1966171168
    %v747 = vunpack.c.0.s8 %v746
    %v748 = vlaneseq
    %v749 = vshrl.u32 %v748, 7
    %v750 = vsub.s32 %v747, %v749
    %v751 = vrot.slane %v743, %v750
    %v753 = vunpack.c.l.s4 1966171168
    %v754 = vunpack.c.0.s8 %v753
    %v755 = vlaneseq
    %v756 = vshrl.u32 %v755, 7
    %v757 = vsub.s32 %v754, %v756
    %v758 = vrot.slane %v744, %v757
    %v762 = vunpack.c.l.s4 1966171168
    %v763 = vunpack.c.0.s8 %v762
    %v764 = vlaneseq
    %v765 = vshrl.u32 %v764, 7
    %v766 = vsub.s32 %v763, %v765
    %v767 = vrot.slane %v284, %v766
    %v768 = vcombine.high %v767, %v767
    %v770 = vunpack.c.l.s4 1966171168
    %v771 = vunpack.c.0.s8 %v770
    %v772 = vlaneseq
    %v773 = vshrl.u32 %v772, 7
    %v774 = vsub.s32 %v771, %v773
    %v775 = vrot.slane %v767, %v774
    %v777 = vunpack.c.l.s4 1966171168
    %v778 = vunpack.c.0.s8 %v777
    %v779 = vlaneseq
    %v780 = vshrl.u32 %v779, 7
    %v781 = vsub.s32 %v778, %v780
    %v782 = vrot.slane %v768, %v781
    %v784 = vunpack.c.l.s4 1966171168
    %v785 = vunpack.c.0.s8 %v784
    %v786 = vlaneseq
    %v787 = vshrl.u32 %v786, 7
    %v788 = vsub.s32 %v785, %v787
    %v789 = vrot.slane %v359, %v788
    %v790 = vcombine.high %v789, %v789
    %v792 = vunpack.c.l.s4 1966171168
    %v793 = vunpack.c.0.s8 %v792
    %v794 = vlaneseq
    %v795 = vshrl.u32 %v794, 7
    %v796 = vsub.s32 %v793, %v795
    %v797 = vrot.slane %v789, %v796
    %v799 = vunpack.c.l.s4 1966171168
    %v800 = vunpack.c.0.s8 %v799
    %v801 = vlaneseq
    %v802 = vshrl.u32 %v801, 7
    %v803 = vsub.s32 %v800, %v802
    %v804 = vrot.slane %v790, %v803
    %v806 = vunpack.c.l.s4 1966171168
    %v807 = vunpack.c.0.s8 %v806
    %v808 = vlaneseq
    %v809 = vshrl.u32 %v808, 7
    %v810 = vsub.s32 %v807, %v809
    %v811 = vrot.slane %v434, %v810
    %v812 = vcombine.high %v811, %v811
    %v814 = vunpack.c.l.s4 1966171168
    %v815 = vunpack.c.0.s8 %v814
    %v816 = vlaneseq
    %v817 = vshrl.u32 %v816, 7
    %v818 = vsub.s32 %v815, %v817
    %v819 = vrot.slane %v811, %v818
    %v821 = vunpack.c.l.s4 1966171168
    %v822 = vunpack.c.0.s8 %v821
    %v823 = vlaneseq
    %v824 = vshrl.u32 %v823, 7
    %v825 = vsub.s32 %v822, %v824
    %v826 = vrot.slane %v812, %v825
    %v828 = vunpack.c.l.s4 1966171168
    %v829 = vunpack.c.0.s8 %v828
    %v830 = vlaneseq
    %v831 = vshrl.u32 %v830, 7
    %v832 = vsub.s32 %v829, %v831
    %v833 = vrot.slane %v509, %v832
    %v834 = vcombine.high %v833, %v833
    %v836 = vunpack.c.l.s4 1966171168
    %v837 = vunpack.c.0.s8 %v836
    %v838 = vlaneseq
    %v839 = vshrl.u32 %v838, 7
    %v840 = vsub.s32 %v837, %v839
    %v841 = vrot.slane %v833, %v840
    %v843 = vunpack.c.l.s4 1966171168
    %v844 = vunpack.c.0.s8 %v843
    %v845 = vlaneseq
    %v846 = vshrl.u32 %v845, 7
    %v847 = vsub.s32 %v844, %v846
    %v848 = vrot.slane %v834, %v847
    %v850 = vunpack.c.l.s4 1966171168
    %v851 = vunpack.c.0.s8 %v850
    %v852 = vlaneseq
    %v853 = vshrl.u32 %v852, 7
    %v854 = vsub.s32 %v851, %v853
    %v855 = vrot.slane %v584, %v854
    %v856 = vcombine.high %v855, %v855
    %v858 = vunpack.c.l.s4 1966171168
    %v859 = vunpack.c.0.s8 %v858
    %v860 = vlaneseq
    %v861 = vshrl.u32 %v860, 7
    %v862 = vsub.s32 %v859, %v861
    %v863 = vrot.slane %v855, %v862
    %v865 = vunpack.c.l.s4 1966171168
    %v866 = vunpack.c.0.s8 %v865
    %v867 = vlaneseq
    %v868 = vshrl.u32 %v867, 7
    %v869 = vsub.s32 %v866, %v868
    %v870 = vrot.slane %v856, %v869
    %v872 = vunpack.c.l.s4 1966171168
    %v873 = vunpack.c.0.s8 %v872
    %v874 = vlaneseq
    %v875 = vshrl.u32 %v874, 7
    %v876 = vsub.s32 %v873, %v875
    %v877 = vrot.slane %v659, %v876
    %v878 = vcombine.high %v877, %v877
    %v880 = vunpack.c.l.s4 1966171168
    %v881 = vunpack.c.0.s8 %v880
    %v882 = vlaneseq
    %v883 = vshrl.u32 %v882, 7
    %v884 = vsub.s32 %v881, %v883
    %v885 = vrot.slane %v877, %v884
    %v887 = vunpack.c.l.s4 1966171168
    %v888 = vunpack.c.0.s8 %v887
    %v889 = vlaneseq
    %v890 = vshrl.u32 %v889, 7
    %v891 = vsub.s32 %v888, %v890
    %v892 = vrot.slane %v878, %v891
    %v895 = vunpack.c.l.s4 1966171168
    %v896 = vunpack.c.0.s8 %v895
    %v897 = vlaneseq
    %v898 = vshrl.u32 %v897, 7
    %v899 = vsub.s32 %v896, %v898
    %v900 = vrot.slane %v734, %v899
    %v901 = vcombine.high %v900, %v900
    %v903 = vunpack.c.l.s4 1966171168
    %v904 = vunpack.c.0.s8 %v903
    %v905 = vlaneseq
    %v906 = vshrl.u32 %v905, 7
    %v907 = vsub.s32 %v904, %v906
    %v908 = vrot.slane %v900, %v907
    %v910 = vunpack.c.l.s4 1966171168
    %v911 = vunpack.c.0.s8 %v910
    %v912 = vlaneseq
    %v913 = vshrl.u32 %v912, 7
    %v914 = vsub.s32 %v911, %v913
    %v915 = vrot.slane %v901, %v914
    %v916 = vlaneseq
    %v917 = vshrl.u32 %v916, 7
    %v918 = vsub.s32 0, %v917
    %v919 = vrot.slane %v775, %v918
    %v920 = vlaneseq
    %v921 = vshrl.u32 %v920, 7
    %v922 = vsub.s32 0, %v921
    %v923 = vrot.slane %v782, %v922
    %v926 = vlaneseq
    %v927 = vshrl.u32 %v926, 7
    %v928 = vsub.s32 0, %v927
    %v929 = vrot.slane %v797, %v928
    %v930 = vlaneseq
    %v931 = vshrl.u32 %v930, 7
    %v932 = vsub.s32 0, %v931
    %v933 = vrot.slane %v804, %v932
    %v936 = vlaneseq
    %v937 = vshrl.u32 %v936, 7
    %v938 = vsub.s32 0, %v937
    %v939 = vrot.slane %v819, %v938
    %v940 = vlaneseq
    %v941 = vshrl.u32 %v940, 7
    %v942 = vsub.s32 0, %v941
    %v943 = vrot.slane %v826, %v942
    %v946 = vlaneseq
    %v947 = vshrl.u32 %v946, 7
    %v948 = vsub.s32 0, %v947
    %v949 = vrot.slane %v841, %v948
    %v950 = vlaneseq
    %v951 = vshrl.u32 %v950, 7
    %v952 = vsub.s32 0, %v951
    %v953 = vrot.slane %v848, %v952
    %v956 = vlaneseq
    %v957 = vshrl.u32 %v956, 7
    %v958 = vsub.s32 0, %v957
    %v959 = vrot.slane %v863, %v958
    %v960 = vlaneseq
    %v961 = vshrl.u32 %v960, 7
    %v962 = vsub.s32 0, %v961
    %v963 = vrot.slane %v870, %v962
    %v966 = vlaneseq
    %v967 = vshrl.u32 %v966, 7
    %v968 = vsub.s32 0, %v967
    %v969 = vrot.slane %v885, %v968
    %v970 = vlaneseq
    %v971 = vshrl.u32 %v970, 7
    %v972 = vsub.s32 0, %v971
    %v973 = vrot.slane %v892, %v972
    %v976 = vlaneseq
    %v977 = vshrl.u32 %v976, 7
    %v978 = vsub.s32 0, %v977
    %v979 = vrot.slane %v908, %v978
    %v980 = vlaneseq
    %v981 = vshrl.u32 %v980, 7
    %v982 = vsub.s32 0, %v981
    %v983 = vrot.slane %v915, %v982
    %v986 = vsel %vm45, %v751, %v919
    %v987 = vsel %vm45, %v758, %v923
    %vm988 = vcmask 1041408
    %v989 = vsel %vm988, %v986, %v929
    %v990 = vsel %vm988, %v987, %v933
    %vm991 = vcmask 1042432
    %v992 = vsel %vm991, %v989, %v939
    %v993 = vsel %vm991, %v990, %v943
    %vm994 = vcmask 1043456
    %v995 = vsel %vm994, %v992, %v949
    %v996 = vsel %vm994, %v993, %v953
    %vm997 = vcmask 1044480
    %v998 = vsel %vm997, %v995, %v959
    %v999 = vsel %vm997, %v996, %v963
    %vm1000 = vcmask 1045504
    %v1001 = vsel %vm1000, %v998, %v969
    %v1002 = vsel %vm1000, %v999, %v973
    %vm1003 = vcmask 1046528
    %v1004 = vsel %vm1003, %v1001, %v979
    %v1005 = vsel %vm1003, %v1002, %v983
    %v1006 = vlaneseq
    %v1007 = vshrl.u32 %v1006, 7
    %v1008 = vsub.s32 2, %v1007
    %v1009 = vrot.slane %v34, %v1008
    %v1010 = vmul.f32 %v1004, %v1009
    %v1011 = vmul.f32 %v1005, %v1009
    %v1012 = vsel %vm134, %v1010, 0.0
    %1013 = vadd.xlane.f32.xlu0 %v1012
    %v1014 = vpop.xlane.xlu0 %1013
    %v1015 = vsel %vm134, %v1011, 0.0
    %1016 = vadd.xlane.f32.xlu0 %v1015
    %v1017 = vpop.xlane.xlu0 %1016
    %v1018 = vstv %s35
    %v1019 = vadd.f32 %v1014, %v1018
    %v1020 = vadd.f32 %v1017, %v1018
    %v1023 = vlaneseq
    %v1024 = vand.u32 %v1023, 127
    %v1025 = vlaneseq
    %v1026 = vshrl.u32 %v1025, 7
    %v1027 = vsub.s32 %v1024, %v1026
    %v1028 = vrot.slane %v1019, %v1027
    %v1029 = vlaneseq
    %v1030 = vshrl.u32 %v1029, 7
    %v1031 = vsub.s32 %v1024, %v1030
    %v1032 = vrot.slane %v1020, %v1031
    %vm1033 = vcmask 1041409
    %v1034 = vsel %vm1033, %v1032, %v1028
    %vm1036 = vcmask 58368
    %1037 = vst.msk [vmem:[#allocation5] sm:$0x3] %vm1036, %v1034
    // Predicated region
    $region22: #{rnn_forward.1} parent=1 // pred_check
      _
    $region23: #{rnn_forward.1} parent=1 // pred_check_branch
      %1039 = sbr.rel (0) target = $region25
    $region24: #{rnn_forward.1} parent=1 // pred_region
      %s1041 = ssub.s32 32, 32
      %1042 = vsyncadd [#allocation3], %s1041
      %s1044 = sshll.u32 [#allocation5], 4
      %s1045 = int_to_ptr.vmem [resolvable:$true] %s1044
      %1047 = dma.vmem_to_hbm [thread:$0]  %s1045, 32, %s4, [#allocation3]
    $region25: #{rnn_forward.1} parent=1 // pred_fallthru
      _
    // Predicated region
    $region26: #{rnn_forward.1} parent=1 // pred_check
      _
    $region27: #{rnn_forward.1} parent=1 // pred_check_branch
      %1049 = sbr.rel (0) target = $region29
    $region28: #{rnn_forward.1} parent=1 // pred_region
      %s1051 = ssub.s32 32, 32
      %1052 = vsyncadd [#allocation7], %s1051
      %s1054 = sshll.u32 [#allocation6], 4
      %s1055 = int_to_ptr.vmem [resolvable:$true] %s1054
      %1057 = dma.vmem_to_hbm [thread:$0]  %s1055, 32, %s5, [#allocation7]
    $region29: #{rnn_forward.1} parent=1 // pred_fallthru
      _
    // Predicated region
    $region30: #{rnn_forward.1} parent=1 // pred_check
      _
    $region31: #{rnn_forward.1} parent=1 // pred_check_branch
      %1059 = sbr.rel (0) target = $region33
    $region32: #{rnn_forward.1} parent=1 // pred_region
      %1060 = dma.done [#allocation3], 32
    $region33: #{rnn_forward.1} parent=1 // pred_fallthru
      _
    // Predicated region
    $region34: #{rnn_forward.1} parent=1 // pred_check
      _
    $region35: #{rnn_forward.1} parent=1 // pred_check_branch
      %1062 = sbr.rel (0) target = $region37
    $region36: #{rnn_forward.1} parent=1 // pred_region
      %1063 = dma.done [#allocation7], 32
    $region37: #{rnn_forward.1} parent=1 // pred_fallthru
      _
    %1064 = vsyncpa [#allocation3], 1
    %1065 = vsyncpa [#allocation7], 1
    %1066 = vsyncpa [#allocation4], 1

</llo_original>
